<compile_context>
chip_gen: v6e
topology: v6e:2x2x1
jax: 0.10.0
libtpu: 0.0.40
codegen_flags: <defaults>
</compile_context>

<pallas_src>
import functools
import math

import jax
import jax.numpy as jnp
from jax.experimental import pallas as pl
from jax.experimental.pallas import tpu as pltpu


def _pick_tile(dim, pref, align):
    """Largest align-multiple tile <= pref that divides dim, else the full dim."""
    if dim <= pref:
        return dim
    t = (pref // align) * align
    while t >= align:
        if dim % t == 0:
            return t
        t -= align
    return dim


# ----------------------------------------------------------------------------
# Tiled linear kernel: y = x @ W.T + b   (PyTorch nn.Linear layout)
# ----------------------------------------------------------------------------
def _linear_kernel(x_ref, w_ref, b_ref, o_ref, acc_ref):
    k_idx = pl.program_id(2)

    @pl.when(k_idx == 0)
    def _():
        acc_ref[...] = jnp.zeros_like(acc_ref)

    # Contract x (tm, tk) with w (tn, tk) along the K axis directly
    # (no .T materialization before the MXU push).
    acc_ref[...] += jax.lax.dot_general(
        x_ref[...], w_ref[...],
        (((1,), (1,)), ((), ())),
        preferred_element_type=jnp.float32,
    )

    @pl.when(k_idx == pl.num_programs(2) - 1)
    def _():
        o_ref[...] = (acc_ref[...] + b_ref[...].astype(jnp.float32)).astype(o_ref.dtype)


def linear_pallas(x, w, b, *, tm=256, tn=256, tk=512):
    """y = x @ w.T + b.  x: (M, K), w: (N, K), b: (N,)."""
    M, K = x.shape
    N = w.shape[0]
    tm = _pick_tile(M, tm, 8)     # sublane side
    tn = _pick_tile(N, tn, 128)   # lane side of the output
    tk = _pick_tile(K, tk, 128)   # lane side of the inputs
    grid = (M // tm, N // tn, K // tk)
    return pl.pallas_call(
        _linear_kernel,
        out_shape=jax.ShapeDtypeStruct((M, N), x.dtype),
        grid=grid,
        in_specs=[
            pl.BlockSpec((tm, tk), lambda i, j, k: (i, k)),
            pl.BlockSpec((tn, tk), lambda i, j, k: (j, k)),
            pl.BlockSpec((1, tn), lambda i, j, k: (0, j)),
        ],
        out_specs=pl.BlockSpec((tm, tn), lambda i, j, k: (i, j)),
        scratch_shapes=[pltpu.VMEM((tm, tn), jnp.float32)],
        compiler_params=pltpu.CompilerParams(
            dimension_semantics=("parallel", "parallel", "arbitrary")),
    )(x, w, b.reshape(1, N))


# ----------------------------------------------------------------------------
# Flash-style multi-head attention kernel, grid = (B, S/tq, S/tkv)
# q/k/v blocks are (tq, D) / (tkv, D) with D = heads * d_k; heads are split
# with static lane slices inside the kernel; output is one (tq, D) slab.
# ----------------------------------------------------------------------------
def _attn_kernel(*refs, heads, d_k, mask_mode):
    if mask_mode == "vec":        # (B, S) padding mask, factored as qm x km
        q_ref, k_ref, v_ref, qm_ref, km_ref, o_ref, m_sc, l_sc, acc_sc = refs
    elif mask_mode == "full":     # (B, S, S) mask, tiled
        q_ref, k_ref, v_ref, m2_ref, o_ref, m_sc, l_sc, acc_sc = refs
    else:                         # no mask
        q_ref, k_ref, v_ref, o_ref, m_sc, l_sc, acc_sc = refs

    ki = pl.program_id(2)

    @pl.when(ki == 0)
    def _():
        m_sc[...] = jnp.full_like(m_sc, -jnp.inf)
        l_sc[...] = jnp.zeros_like(l_sc)
        acc_sc[...] = jnp.zeros_like(acc_sc)

    q = q_ref[...]          # (tq, D); 1/sqrt(d_k) already folded into W_q
    k = k_ref[...]          # (tkv, D)
    v = v_ref[...]          # (tkv, D)

    if mask_mode == "vec":
        # (tq,1) & (1,tkv) -> (tq,tkv); reproduces masked_fill(mask@mask.T==0)
        valid = (qm_ref[...] > 0.0) & (km_ref[...] > 0.0)
    elif mask_mode == "full":
        valid = m2_ref[...] > 0.0

    qk_dims = (((1,), (1,)), ((), ()))   # contract d_k: q @ k.T without .T
    pv_dims = (((1,), (0,)), ((), ()))   # p @ v_h

    for h in range(heads):
        sl = slice(h * d_k, (h + 1) * d_k)
        s = jax.lax.dot_general(q[:, sl], k[:, sl], qk_dims,
                                preferred_element_type=jnp.float32)   # (tq, tkv)
        if mask_mode != "none":
            s = jnp.where(valid, s, jnp.float32(-1000000000.0))

        m_prev = m_sc[h]                                              # (tq, 1)
        m_new = jnp.maximum(m_prev, s.max(axis=-1, keepdims=True))
        alpha = jnp.exp(m_prev - m_new)
        p = jnp.exp(s - m_new)                                        # (tq, tkv)
        l_sc[h] = alpha * l_sc[h] + p.sum(axis=-1, keepdims=True)
        acc_sc[:, sl] = alpha * acc_sc[:, sl] + jax.lax.dot_general(
            p.astype(v.dtype), v[:, sl], pv_dims,
            preferred_element_type=jnp.float32)
        m_sc[h] = m_new

    @pl.when(ki == pl.num_programs(2) - 1)
    def _():
        for h in range(heads):
            sl = slice(h * d_k, (h + 1) * d_k)
            acc_sc[:, sl] = acc_sc[:, sl] * pl.reciprocal(l_sc[h], approx=True)
        # Single lane-dense (tq, D) store of the already-concatenated heads.
        o_ref[...] = acc_sc[...].astype(o_ref.dtype)


def attention_pallas(qp, kp, vp, heads, d_k, qmask=None, kmask=None, mask2d=None,
                     *, tq=256, tkv=256):
    """qp/kp/vp: (B, S, D) with D = heads*d_k.  Returns (B, S, D)."""
    B, S, D = qp.shape
    tq = _pick_tile(S, tq, 8)
    tkv = _pick_tile(S, tkv, 128)

    if mask2d is not None:
        mask_mode = "full"
    elif qmask is not None:
        mask_mode = "vec"
    else:
        mask_mode = "none"

    kernel = functools.partial(_attn_kernel, heads=heads, d_k=d_k,
                               mask_mode=mask_mode)

    in_specs = [
        pl.BlockSpec((None, tq, D), lambda b, qi, ki: (b, qi, 0)),
        pl.BlockSpec((None, tkv, D), lambda b, qi, ki: (b, ki, 0)),
        pl.BlockSpec((None, tkv, D), lambda b, qi, ki: (b, ki, 0)),
    ]
    args = [qp, kp, vp]
    if mask_mode == "vec":
        in_specs += [
            pl.BlockSpec((None, tq, 1), lambda b, qi, ki: (b, qi, 0)),
            pl.BlockSpec((None, 1, tkv), lambda b, qi, ki: (b, 0, ki)),
        ]
        args += [qmask, kmask]
    elif mask_mode == "full":
        in_specs += [pl.BlockSpec((None, tq, tkv), lambda b, qi, ki: (b, qi, ki))]
        args += [mask2d]

    return pl.pallas_call(
        kernel,
        out_shape=jax.ShapeDtypeStruct((B, S, D), qp.dtype),
        grid=(B, S // tq, S // tkv),
        in_specs=in_specs,
        out_specs=pl.BlockSpec((None, tq, D), lambda b, qi, ki: (b, qi, 0)),
        scratch_shapes=[
            pltpu.VMEM((heads, tq, 1), jnp.float32),   # running max per head
            pltpu.VMEM((heads, tq, 1), jnp.float32),   # running sum per head
            pltpu.VMEM((tq, D), jnp.float32),          # output accumulator
        ],
        compiler_params=pltpu.CompilerParams(
            dimension_semantics=("parallel", "parallel", "arbitrary")),
    )(*args)


# ----------------------------------------------------------------------------
# MultiHeadAttention forward (glue in plain JAX, hot paths in Pallas)
# ----------------------------------------------------------------------------
def init_mha_params(key, d_model, dtype=jnp.float32):
    """Deterministic init mimicking nn.Linear(d_model, d_model) param shapes."""
    ks = jax.random.split(key, 8)
    bound = 1.0 / math.sqrt(d_model)

    def u(k, shape):
        return jax.random.uniform(k, shape, dtype, minval=-bound, maxval=bound)

    return {
        "wq": u(ks[0], (d_model, d_model)), "bq": u(ks[1], (d_model,)),
        "wk": u(ks[2], (d_model, d_model)), "bk": u(ks[3], (d_model,)),
        "wv": u(ks[4], (d_model, d_model)), "bv": u(ks[5], (d_model,)),
        "wo": u(ks[6], (d_model, d_model)), "bo": u(ks[7], (d_model,)),
    }


def multi_head_attention_forward(params, q, k, v, heads, mask=None):
    B, S, D = q.shape
    d_k = D // heads
    scale = 1.0 / math.sqrt(d_k)

    # Fold the 1/sqrt(d_k) softmax scale into the Q projection (weight-sized
    # multiply, amortized) instead of scaling every (S, S) score tile.
    wq, bq = params["wq"] * scale, params["bq"] * scale

    q2 = q.reshape(B * S, D)
    k2 = k.reshape(B * S, D)
    v2 = v.reshape(B * S, D)

    if (q is k) and (k is v):
        # Self-attention: fuse Q/K/V into one (3D x D) projection -> one pass
        # over the activations and one kernel launch instead of three.
        wf = jnp.concatenate([wq, params["wk"], params["wv"]], axis=0)
        bf = jnp.concatenate([bq, params["bk"], params["bv"]])
        qkv = linear_pallas(q2, wf, bf)          # (B*S, 3D)
        qp, kp, vp = qkv[:, :D], qkv[:, D:2 * D], qkv[:, 2 * D:]
    else:
        qp = linear_pallas(q2, wq, bq)
        kp = linear_pallas(k2, params["wk"], params["bk"])
        vp = linear_pallas(v2, params["wv"], params["bv"])

    qp = qp.reshape(B, S, D)
    kp = kp.reshape(B, S, D)
    vp = vp.reshape(B, S, D)

    # Attention directly on the (B, S, D) layout; mask stays (B, S) — the
    # pairwise mask is computed in-kernel (no (B, S, S) tensor in HBM).
    if mask is None:
        out = attention_pallas(qp, kp, vp, heads, d_k)
    elif mask.ndim == 2:
        qm = mask.astype(jnp.float32).reshape(B, S, 1)
        km = mask.astype(jnp.float32).reshape(B, 1, S)
        out = attention_pallas(qp, kp, vp, heads, d_k, qmask=qm, kmask=km)
    else:                                        # (B, S, S) mask
        out = attention_pallas(qp, kp, vp, heads, d_k,
                               mask2d=mask.astype(jnp.float32))

    # TODO(synk): nn.Dropout(0.1) on attention probs: eval-mode identity.

    # Output projection (no transpose/concat needed: kernel already wrote
    # (B, S, H*d_k) in the PyTorch concat layout).
    out = linear_pallas(out.reshape(B * S, D), params["wo"], params["bo"])
    return out.reshape(B, S, D)


# Pure-JAX reference for a quick sanity check (mirrors the PyTorch module).
def _reference_forward(params, q, k, v, heads, mask=None):
    B, S, D = q.shape
    d_k = D // heads
    qp = q.reshape(B * S, D) @ params["wq"].T + params["bq"]
    kp = k.reshape(B * S, D) @ params["wk"].T + params["bk"]
    vp = v.reshape(B * S, D) @ params["wv"].T + params["bv"]
    qh = jnp.transpose(qp.reshape(B, S, heads, d_k), (0, 2, 1, 3))
    kh = jnp.transpose(kp.reshape(B, S, heads, d_k), (0, 2, 1, 3))
    vh = jnp.transpose(vp.reshape(B, S, heads, d_k), (0, 2, 1, 3))
    scores = jnp.einsum("bhqd,bhkd->bhqk", qh, kh) / math.sqrt(d_k)
    if mask is not None:
        if mask.ndim == 2:
            m = mask.astype(jnp.float32)
            m2 = (m[:, :, None] * m[:, None, :])[:, None, :, :]
        else:
            m2 = mask.astype(jnp.float32)[:, None, :, :]
        scores = jnp.where(m2 == 0.0, -1000000000.0, scores)
    probs = jax.nn.softmax(scores, axis=-1)
    out_h = jnp.einsum("bhqk,bhkd->bhqd", probs, vh)
    concat = jnp.transpose(out_h, (0, 2, 1, 3)).reshape(B, S, D)
    return (concat.reshape(B * S, D) @ params["wo"].T + params["bo"]).reshape(B, S, D)


if __name__ == "__main__":
    B, S, D, H = 2, 8, 32, 4  # batch, seq, d_model, heads

    key = jax.random.PRNGKey(0)
    kq, kk, kv, kp, km = jax.random.split(key, 5)
    q = jax.random.normal(kq, (B, S, D), jnp.float32)
    k = jax.random.normal(kk, (B, S, D), jnp.float32)
    v = jax.random.normal(kv, (B, S, D), jnp.float32)
    params = init_mha_params(kp, D)

    # 2-D padding-style mask (B, S): 1 = keep, 0 = pad.
    mask = (jax.random.uniform(km, (B, S)) > 0.2).astype(jnp.float32)
    mask3 = mask[:, :, None] * mask[:, None, :]        # equivalent (B, S, S) mask

    out = jax.block_until_ready(
        multi_head_attention_forward(params, q, k, v, H, mask=mask))
    out_nomask = jax.block_until_ready(
        multi_head_attention_forward(params, q, k, v, H, mask=None))
    out_mask3 = jax.block_until_ready(
        multi_head_attention_forward(params, q, k, v, H, mask=mask3))
    out_self = jax.block_until_ready(            # exercises the fused QKV path
        multi_head_attention_forward(params, q, q, q, H, mask=mask))

    ref = _reference_forward(params, q, k, v, H, mask=mask)
    ref_nomask = _reference_forward(params, q, k, v, H, mask=None)
    ref_self = _reference_forward(params, q, q, q, H, mask=mask)

    assert out.shape == (B, S, D)
    assert jnp.allclose(out, ref, rtol=1e-2, atol=1e-2)
    assert jnp.allclose(out_nomask, ref_nomask, rtol=1e-2, atol=1e-2)
    assert jnp.allclose(out_mask3, ref, rtol=1e-2, atol=1e-2)
    assert jnp.allclose(out_self, ref_self, rtol=1e-2, atol=1e-2)

    print("KERNEL_OK")
</pallas_src>

<mosaic_0001>
module attributes {stable_mosaic.version = 11 : i64} {
  func.func @_linear_kernel(%arg0: i32, %arg1: i32, %arg2: i32, %arg3: memref<16x32xf32, #tpu.memory_space<vmem>>, %arg4: memref<32x32xf32, #tpu.memory_space<vmem>>, %arg5: memref<1x32xf32, #tpu.memory_space<vmem>>, %arg6: memref<16x32xf32, #tpu.memory_space<vmem>>, %arg7: memref<16x32xf32, #tpu.memory_space<vmem>>) attributes {dimension_semantics = [#tpu.dimension_semantics<parallel>, #tpu.dimension_semantics<parallel>, #tpu.dimension_semantics<arbitrary>], iteration_bounds = array<i64: 1, 1, 1>, scalar_prefetch = 0 : i64, scratch_operands = 1 : i64, tpu.core_type = #tpu.core_type<tc>, window_params = [{transform_indices = @transform_0, window_bounds = array<i64: 16, 32>}, {transform_indices = @transform_1, window_bounds = array<i64: 32, 32>}, {transform_indices = @transform_2, window_bounds = array<i64: 1, 32>}, {transform_indices = @transform_3, window_bounds = array<i64: 16, 32>}]} {
    %c0_i32 = arith.constant 0 : i32
    %0 = arith.cmpi eq, %arg2, %c0_i32 : i32
    %1 = arith.extui %0 : i1 to i32
    %c0_i32_0 = arith.constant 0 : i32
    %2 = arith.cmpi ne, %1, %c0_i32_0 : i32
    scf.if %2 {
      %cst_10 = arith.constant 0.000000e+00 : f32
      %12 = vector.broadcast %cst_10 : f32 to vector<16x32xf32>
      %c0_11 = arith.constant 0 : index
      %c0_12 = arith.constant 0 : index
      %13 = vector.load %arg7[%c0_11, %c0_12] : memref<16x32xf32, #tpu.memory_space<vmem>>, vector<16x32xf32>
      tpu.vector_store %arg7[%c0_11, %c0_12], %12 {strides = array<i32>} : memref<16x32xf32, #tpu.memory_space<vmem>>, vector<16x32xf32>,
    } else {
    }
    %c0 = arith.constant 0 : index
    %c0_1 = arith.constant 0 : index
    %3 = vector.load %arg7[%c0, %c0_1] : memref<16x32xf32, #tpu.memory_space<vmem>>, vector<16x32xf32>
    %c0_2 = arith.constant 0 : index
    %c0_3 = arith.constant 0 : index
    %4 = vector.load %arg3[%c0_2, %c0_3] : memref<16x32xf32, #tpu.memory_space<vmem>>, vector<16x32xf32>
    %c0_4 = arith.constant 0 : index
    %c0_5 = arith.constant 0 : index
    %5 = vector.load %arg4[%c0_4, %c0_5] : memref<32x32xf32, #tpu.memory_space<vmem>>, vector<32x32xf32>
    %cst = arith.constant dense<0.000000e+00> : vector<16x32xf32>
    %6 = tpu.matmul %4, %5, %cst {dimension_numbers = #tpu.dot_dimension_numbers<[1], [1], [0], [0], [0, 0, 1, 0], [], []>} : vector<16x32xf32>, vector<32x32xf32>, vector<16x32xf32> -> vector<16x32xf32>
    %7 = arith.addf %3, %6 : vector<16x32xf32>
    %c0_6 = arith.constant 0 : index
    %c0_7 = arith.constant 0 : index
    %8 = vector.load %arg7[%c0_6, %c0_7] : memref<16x32xf32, #tpu.memory_space<vmem>>, vector<16x32xf32>
    tpu.vector_store %arg7[%c0_6, %c0_7], %7 {strides = array<i32>} : memref<16x32xf32, #tpu.memory_space<vmem>>, vector<16x32xf32>,
    %c0_i32_8 = arith.constant 0 : i32
    %9 = arith.cmpi eq, %arg2, %c0_i32_8 : i32
    %10 = arith.extui %9 : i1 to i32
    %c0_i32_9 = arith.constant 0 : i32
    %11 = arith.cmpi ne, %10, %c0_i32_9 : i32
    scf.if %11 {
      %c0_10 = arith.constant 0 : index
      %c0_11 = arith.constant 0 : index
      %12 = vector.load %arg7[%c0_10, %c0_11] : memref<16x32xf32, #tpu.memory_space<vmem>>, vector<16x32xf32>
      %c0_12 = arith.constant 0 : index
      %c0_13 = arith.constant 0 : index
      %13 = vector.load %arg5[%c0_12, %c0_13] : memref<1x32xf32, #tpu.memory_space<vmem>>, vector<1x32xf32>
      %14 = vector.broadcast %13 : vector<1x32xf32> to vector<16x32xf32>
      %15 = arith.addf %12, %14 : vector<16x32xf32>
      %c0_14 = arith.constant 0 : index
      %c0_15 = arith.constant 0 : index
      %16 = vector.load %arg6[%c0_14, %c0_15] : memref<16x32xf32, #tpu.memory_space<vmem>>, vector<16x32xf32>
      tpu.vector_store %arg6[%c0_14, %c0_15], %15 {strides = array<i32>} : memref<16x32xf32, #tpu.memory_space<vmem>>, vector<16x32xf32>,
    } else {
    }
    return
  }
  func.func @transform_0(%arg0: i32, %arg1: i32, %arg2: i32) -> (i32, i32) {
    %c0_i32 = arith.constant 0 : i32
    return %arg0, %arg2 : i32, i32
  }
  func.func @transform_1(%arg0: i32, %arg1: i32, %arg2: i32) -> (i32, i32) {
    %c0_i32 = arith.constant 0 : i32
    return %arg1, %arg2 : i32, i32
  }
  func.func @transform_2(%arg0: i32, %arg1: i32, %arg2: i32) -> (i32, i32) {
    %c0_i32 = arith.constant 0 : i32
    %c0_i32_0 = arith.constant 0 : i32
    return %c0_i32, %arg1 : i32, i32
  }
  func.func @transform_3(%arg0: i32, %arg1: i32, %arg2: i32) -> (i32, i32) {
    %c0_i32 = arith.constant 0 : i32
    return %arg0, %arg1 : i32, i32
  }
}

</mosaic_0001>

<llo_original>
// kernel: tpu_custom_call.1
$region0: #{tpu_custom_call.1}
  #allocation0 [shape = 'u32[]', space=smem, size = 0x4, offset = 0x4, fixed_abs, tag = 'smem constant byte address 0x4 - core index']
  #allocation1 [shape = 'u32[144,128]{1,0:T(1,128)}', space=vmem, size = 0x12000, scoped, tag = 'internal scratch']
  #allocation2 [shape = 'f32[16,32]{1,0:T(8,128)}', space=vmem, size = 0x2000, scoped, tag = 'scratch operand']
  %s0 = inlined_call_operand.hbm [shape: f32[16,32], index: 0, kind: input, shape index: {}]
  %s1 = inlined_call_operand.hbm [shape: f32[32,32], index: 1, kind: input, shape index: {}]
  %s2 = inlined_call_operand.vmem [shape: f32[1,32], index: 2, kind: input, shape index: {}]
  %s3 = inlined_call_operand.hbm [shape: f32[16,32], index: 3, kind: output, shape index: {}]
  %s4 = sld [smem:[#allocation0]]
  $region38: #{tpu_custom_call.1} parent=0
    _
  %s6 = ssub.s32 1, %s4
  %s7 = scalar_select 0, %s6, %s4
  $region1: #{tpu_custom_call.1} parent=0
    #allocation3 [shape = 'u8[8192]{0}', space=vmem, size = 0x2000, scoped, tag = 'input window, operand 0, single buffered']
    #allocation4 [shape = 's32[1]{0}', space=sflag, size = 0x4, scoped, tag = 'scoped memory for tpu_custom_call.1']
    #allocation5 [shape = 's32[1]{0}', space=sflag, size = 0x4, scoped, tag = 'scoped memory for tpu_custom_call.1']
    #allocation6 [shape = 'u8[16384]{0}', space=vmem, size = 0x4000, scoped, tag = 'input window, operand 1, single buffered']
    #allocation7 [shape = 's32[1]{0}', space=sflag, size = 0x4, scoped, tag = 'scoped memory for tpu_custom_call.1']
    #allocation8 [shape = 'u8[8192]{0}', space=vmem, size = 0x2000, scoped, tag = 'output window, operand 0, single buffered']
    %8 = vsyncpa [#allocation4], 0
    %9 = vsyncpa [#allocation7], 0
    %10 = vsyncpa [#allocation5], 0
    // Predicated region
    $region2: #{tpu_custom_call.1} parent=1 // pred_check
      _
    $region3: #{tpu_custom_call.1} parent=1 // pred_check_branch
      %12 = sbr.rel (0) target = $region5
    $region4: #{tpu_custom_call.1} parent=1 // pred_region
      %s14 = ssub.s32 256, 256
      %15 = vsyncadd [#allocation4], %s14
      %s16 = sshll.u32 [#allocation3], 4
      %s17 = int_to_ptr.vmem [resolvable:$true] %s16
      %22 = dma.hbm_to_vmem [thread:$0]  %s0, 256, %s17, [#allocation4], 128, 128, 8
    $region5: #{tpu_custom_call.1} parent=1 // pred_fallthru
      _
    // Predicated region
    $region6: #{tpu_custom_call.1} parent=1 // pred_check
      _
    $region7: #{tpu_custom_call.1} parent=1 // pred_check_branch
      %24 = sbr.rel (0) target = $region9
    $region8: #{tpu_custom_call.1} parent=1 // pred_region
      %s26 = ssub.s32 512, 512
      %27 = vsyncadd [#allocation7], %s26
      %s28 = sshll.u32 [#allocation6], 4
      %s29 = int_to_ptr.vmem [resolvable:$true] %s28
      %34 = dma.hbm_to_vmem [thread:$0]  %s1, 512, %s29, [#allocation7], 128, 128, 8
    $region9: #{tpu_custom_call.1} parent=1 // pred_fallthru
      _
    // Predicated region
    $region10: #{tpu_custom_call.1} parent=1 // pred_check
      _
    $region11: #{tpu_custom_call.1} parent=1 // pred_check_branch
      %36 = sbr.rel (0) target = $region13
    $region12: #{tpu_custom_call.1} parent=1 // pred_region
      _
    $region13: #{tpu_custom_call.1} parent=1 // pred_fallthru
      _
    // Predicated region
    $region14: #{tpu_custom_call.1} parent=1 // pred_check
      _
    $region15: #{tpu_custom_call.1} parent=1 // pred_check_branch
      %38 = sbr.rel (0) target = $region17
    $region16: #{tpu_custom_call.1} parent=1 // pred_region
      %39 = dma.done [#allocation4], 256
    $region17: #{tpu_custom_call.1} parent=1 // pred_fallthru
      _
    // Predicated region
    $region18: #{tpu_custom_call.1} parent=1 // pred_check
      _
    $region19: #{tpu_custom_call.1} parent=1 // pred_check_branch
      %41 = sbr.rel (0) target = $region21
    $region20: #{tpu_custom_call.1} parent=1 // pred_region
      %42 = dma.done [#allocation7], 512
    $region21: #{tpu_custom_call.1} parent=1 // pred_fallthru
      _
    %p43 = scmp.eq.s32.totalorder 0, 0
    // Predicated region
    $region22: #{tpu_custom_call.1} parent=1 // pred_check
      %p44 = pneg %p43
    $region23: #{tpu_custom_call.1} parent=1 // pred_check_branch
      %46 = sbr.rel (%p44) target = $region25
    $region24: #{tpu_custom_call.1} parent=1 // pred_region
      %vm47 = vcmask 261120
      %48 = vst.msk [vmem:[#allocation2] sm:$0xff] %vm47, 0.0
      %49 = vst.msk [vmem:[#allocation2 + $0x8] sm:$0xff] %vm47, 0.0
    $region25: #{tpu_custom_call.1} parent=1 // pred_fallthru
      _
    %v50 = vld [vmem:[#allocation2] sm:$0xff]
    %v51 = vld [vmem:[#allocation2 + $0x8] sm:$0xff]
    %v52 = vld [vmem:[#allocation3] sm:$0xff]
    %v53 = vld [vmem:[#allocation3 + $0x8] sm:$0xff]
    %v54 = vld [vmem:[#allocation6] sm:$0xff]
    %v55 = vld [vmem:[#allocation6 + $0x8] sm:$0xff]
    %v56 = vld [vmem:[#allocation6 + $0x10] sm:$0xff]
    %v57 = vld [vmem:[#allocation6 + $0x18] sm:$0xff]
    %vm58 = vcmask 261120
    %v60 = vsel %vm58, %v52, 0
    %v63 = vsel %vm58, %v53, 0
    %v66 = vsel %vm58, %v54, 0
    %v69 = vsel %vm58, %v55, 0
    %v72 = vsel %vm58, %v56, 0
    %v75 = vsel %vm58, %v57, 0
    %77 = vmatprep.subr.mxu0 0.0
    %78 = vmatpush1.xpose.msra.mxu0 0.0
    %79 = vmatprep.subr.mxu0 0.0
    %80 = vmatpush1.xpose.msra.mxu0 0.0
    %81 = vmatprep.subr.mxu0 0.0
    %82 = vmatpush1.xpose.msra.mxu0 0.0
    %83 = vmatprep.subr.mxu0 0.0
    %84 = vmatpush1.xpose.msra.mxu0 0.0
    %85 = vmatprep.subr.mxu0 0.0
    %86 = vmatpush1.xpose.msra.mxu0 0.0
    %87 = vmatprep.subr.mxu0 0.0
    %88 = vmatpush1.xpose.msra.mxu0 0.0
    %89 = vmatprep.subr.mxu0 0.0
    %90 = vmatpush1.xpose.msra.mxu0 0.0
    %91 = vmatprep.subr.mxu0 0.0
    %92 = vmatpush1.xpose.msra.mxu0 0.0
    %93 = vmatprep.subr.mxu0 0.0
    %94 = vmatpush1.xpose.msra.mxu0 0.0
    %95 = vmatprep.subr.mxu0 0.0
    %96 = vmatpush1.xpose.msra.mxu0 0.0
    %97 = vmatprep.subr.mxu0 0.0
    %98 = vmatpush1.xpose.msra.mxu0 0.0
    %99 = vmatprep.subr.mxu0 0.0
    %100 = vmatpush1.xpose.msra.mxu0 0.0
    %101 = vmatprep.subr.mxu0 0.0
    %102 = vmatpush1.xpose.msra.mxu0 %v75
    %103 = vmatprep.subr.mxu0 0.0
    %104 = vmatpush1.xpose.msra.mxu0 %v72
    %105 = vmatprep.subr.mxu0 0.0
    %106 = vmatpush1.xpose.msra.mxu0 %v69
    %107 = vmatprep.subr.mxu0 0.0
    %108 = vmatpush1.xpose.msra.mxu0 %v66
    %109 = vmatprep.subr.mxu0 0.0
    %110 = vmatpush2.xpose.msra.mxu0 0.0
    %111 = vmatprep.subr.mxu0 0.0
    %112 = vmatpush2.xpose.msra.mxu0 0.0
    %113 = vmatprep.subr.mxu0 0.0
    %114 = vmatpush2.xpose.msra.mxu0 0.0
    %115 = vmatprep.subr.mxu0 0.0
    %116 = vmatpush2.xpose.msra.mxu0 0.0
    %117 = vmatprep.subr.mxu0 0.0
    %118 = vmatpush2.xpose.msra.mxu0 0.0
    %119 = vmatprep.subr.mxu0 0.0
    %120 = vmatpush2.xpose.msra.mxu0 0.0
    %121 = vmatprep.subr.mxu0 0.0
    %122 = vmatpush2.xpose.msra.mxu0 0.0
    %123 = vmatprep.subr.mxu0 0.0
    %124 = vmatpush2.xpose.msra.mxu0 0.0
    %125 = vmatprep.subr.mxu0 0.0
    %126 = vmatpush2.xpose.msra.mxu0 0.0
    %127 = vmatprep.subr.mxu0 0.0
    %128 = vmatpush2.xpose.msra.mxu0 0.0
    %129 = vmatprep.subr.mxu0 0.0
    %130 = vmatpush2.xpose.msra.mxu0 0.0
    %131 = vmatprep.subr.mxu0 0.0
    %132 = vmatpush2.xpose.msra.mxu0 0.0
    %133 = vmatprep.subr.mxu0 0.0
    %134 = vmatpush2.xpose.msra.mxu0 0.0
    %135 = vmatprep.subr.mxu0 0.0
    %136 = vmatpush2.xpose.msra.mxu0 0.0
    %137 = vmatprep.subr.mxu0 0.0
    %138 = vmatpush2.xpose.msra.mxu0 0.0
    %139 = vmatprep.subr.mxu0 0.0
    %140 = vmatpush2.xpose.msra.mxu0 0.0
    %141 = vmatprep.mubr.f32.mxu0 0.0
    %142 = vmatmul.mubr.f32.gmra.mxu0 %v60
    %v143 = vpop.f32.mrf.mxu0
    %v144 = vadd.f32 0.0, %v143
    %v145 = vpop.f32.mrf.mxu0
    %146 = vmatprep.mubr.f32.mxu0 0.0
    %147 = vmatmul.mubr.f32.gmra.mxu0 %v63
    %v148 = vpop.f32.mrf.mxu0
    %v149 = vadd.f32 0.0, %v148
    %v150 = vpop.f32.mrf.mxu0
    %151 = vdwg.mxu0
    %v152 = vadd.f32 %v50, %v144
    %v153 = vadd.f32 %v51, %v149
    %154 = vst.msk [vmem:[#allocation2] sm:$0xff] %vm58, %v152
    %155 = vst.msk [vmem:[#allocation2 + $0x8] sm:$0xff] %vm58, %v153
    // Predicated region
    $region26: #{tpu_custom_call.1} parent=1 // pred_check
      %p156 = pneg %p43
    $region27: #{tpu_custom_call.1} parent=1 // pred_check_branch
      %158 = sbr.rel (%p156) target = $region29
    $region28: #{tpu_custom_call.1} parent=1 // pred_region
      %v159 = vld [vmem:[#allocation2] sm:$0xff]
      %v160 = vld [vmem:[#allocation2 + $0x8] sm:$0xff]
      %v161 = vld [vmem:[%s2] sm:$0x1]
      %v163 = vlaneseq
      %v164 = vshrl.u32 %v163, 7
      %v165 = vsub.s32 0, %v164
      %v166 = vrot.slane %v161, %v165
      %v168 = vadd.f32 %v159, %v166
      %v169 = vadd.f32 %v160, %v166
      %170 = vst.msk [vmem:[#allocation8] sm:$0xff] %vm58, %v168
      %171 = vst.msk [vmem:[#allocation8 + $0x8] sm:$0xff] %vm58, %v169
    $region29: #{tpu_custom_call.1} parent=1 // pred_fallthru
      _
    // Predicated region
    $region30: #{tpu_custom_call.1} parent=1 // pred_check
      _
    $region31: #{tpu_custom_call.1} parent=1 // pred_check_branch
      %173 = sbr.rel (0) target = $region33
    $region32: #{tpu_custom_call.1} parent=1 // pred_region
      %s175 = ssub.s32 256, 256
      %176 = vsyncadd [#allocation5], %s175
      %s177 = sshll.u32 [#allocation8], 4
      %s178 = int_to_ptr.vmem [resolvable:$true] %s177
      %183 = dma.vmem_to_hbm [thread:$0]  %s178, 256, %s3, [#allocation5], 128, 128, 8
    $region33: #{tpu_custom_call.1} parent=1 // pred_fallthru
      _
    // Predicated region
    $region34: #{tpu_custom_call.1} parent=1 // pred_check
      _
    $region35: #{tpu_custom_call.1} parent=1 // pred_check_branch
      %185 = sbr.rel (0) target = $region37
    $region36: #{tpu_custom_call.1} parent=1 // pred_region
      %186 = dma.done [#allocation5], 256
    $region37: #{tpu_custom_call.1} parent=1 // pred_fallthru
      _
    %187 = vsyncpa [#allocation4], 1
    %188 = vsyncpa [#allocation7], 1
    %189 = vsyncpa [#allocation5], 1

</llo_original>
